<compile_context>
chip_gen: v7x
topology: tpu7x:2x2x1
jax: 0.10.0
libtpu: 0.0.40
codegen_flags: <defaults>
</compile_context>

<pallas_src>
import functools

import jax
import jax.numpy as jnp
from jax.experimental import pallas as pl
from jax.experimental.pallas import tpu as pltpu


def _nll_loss_kernel(pred_ref, target_ref, partial_ref, *, n_total: int, tiles_per_core: int):
    # pred_ref:    (tn, C)  log-probabilities (native dtype) in VMEM
    # target_ref:  (tn, 1)  int16 class indices in VMEM
    # partial_ref: (1, 1, C) float32 per-core partial sums (VMEM, resident across axis 1)
    ci = pl.program_id(0)   # core-split axis ("parallel")
    j = pl.program_id(1)    # row-tile axis  ("arbitrary", accumulator resident)

    @pl.when(j == 0)
    def _init():
        partial_ref[...] = jnp.zeros_like(partial_ref)

    # Upcast after the load (keeps HBM->VMEM traffic at the input's native width).
    pred = pred_ref[...].astype(jnp.float32)        # (tn, C)
    tgt = target_ref[...].astype(jnp.int32)         # (tn, 1)
    tn, n_cls = pred.shape

    # One-hot gather of pred[r, target[r]] + cheap ragged-row mask:
    #   col iota is (tn, C); the row-validity mask is only (tn, 1) and broadcasts.
    col = jax.lax.broadcasted_iota(jnp.int32, (tn, n_cls), 1)
    row = jax.lax.broadcasted_iota(jnp.int32, (tn, 1), 0)
    rows_valid = n_total - (ci * tiles_per_core + j) * tn   # may be <=0 for phantom tiles
    mask = (col == tgt) & (row < rows_valid)

    picked = jnp.where(mask, pred, 0.0)             # select: padded-row garbage can't leak
    # Per-class partial sums (sublane reduce, XLU has slack) + plain vector accumulate.
    partial_ref[...] += jnp.sum(picked, axis=0, keepdims=True).reshape(partial_ref.shape)


def get_loss(pred, target, trans_feat=None, *, tile_n=8192):
    """NLL loss, mean reduction (== F.nll_loss(pred, target)); trans_feat is ignored."""
    n_rows, n_cls = pred.shape
    # int16 halves the lane-padded (N,1) index stream vs int32 (C=40 fits easily).
    target2d = target.astype(jnp.int16).reshape(n_rows, 1)

    if n_rows <= tile_n:
        block_n, num_tiles = n_rows, 1
    else:
        block_n, num_tiles = tile_n, pl.cdiv(n_rows, tile_n)

    # Leading "parallel" axis: shards row tiles across v7x's 2 TensorCores; on 1-TC
    # chips it simply runs serially. Phantom tiles (odd tile counts) are clamped below.
    num_cores = 2 if num_tiles >= 2 else 1
    tiles_per_core = pl.cdiv(num_tiles, num_cores)
    last_block = num_tiles - 1

    def row_block(ci, j):
        # Clamp so a phantom tile re-reads the last real block (its rows are masked).
        return jnp.minimum(ci * tiles_per_core + j, last_block)

    kernel = functools.partial(_nll_loss_kernel, n_total=n_rows, tiles_per_core=tiles_per_core)

    partials = pl.pallas_call(
        kernel,
        out_shape=jax.ShapeDtypeStruct((num_cores, 1, n_cls), jnp.float32),
        grid=(num_cores, tiles_per_core),
        in_specs=[
            pl.BlockSpec((block_n, n_cls), lambda ci, j: (row_block(ci, j), 0)),
            pl.BlockSpec((block_n, 1), lambda ci, j: (row_block(ci, j), 0)),
        ],
        out_specs=pl.BlockSpec((1, 1, n_cls), lambda ci, j: (ci, 0, 0)),
        compiler_params=pltpu.CompilerParams(
            dimension_semantics=("parallel", "arbitrary"),
            # Explicit budget: f32 pred @ 8192 rows double-buffered (8 MiB) + lane-padded
            # i16 target (4 MiB) + partials; safe on v5e/v6e (128 MiB) and v7x (64 MiB).
            vmem_limit_bytes=32 * 1024 * 1024,
        ),
        cost_estimate=pl.CostEstimate(
            flops=3 * n_rows * n_cls,
            transcendentals=0,
            # Lane-padded HBM traffic: pred padded to 128 lanes, target (N,1) i16 likewise.
            bytes_accessed=n_rows * 128 * pred.dtype.itemsize
            + n_rows * 128 * 2
            + num_cores * n_cls * 4,
        ),
    )(pred, target2d)

    # Tiny cross-class / cross-core reduce + compile-time -1/N scale in the wrapper.
    return jnp.sum(partials) * jnp.float32(-1.0 / n_rows)


if __name__ == "__main__":
    key = jax.random.PRNGKey(0)
    k1, k2, k3 = jax.random.split(key, 3)

    # PointNet++ classification sizes: small batch, 40 classes (ModelNet40-style)
    N, C = 8, 40
    logits = jax.random.normal(k1, (N, C), dtype=jnp.float32)
    pred = jax.nn.log_softmax(logits, axis=-1)             # log-probs, like the model output
    target = jax.random.randint(k2, (N,), 0, C, dtype=jnp.int32)
    trans_feat = jax.random.normal(k3, (N, 64, 16), dtype=jnp.float32)  # unused, as in PyTorch

    loss = get_loss(pred, target, trans_feat)
    jax.block_until_ready(loss)
    ref = -jnp.mean(pred[jnp.arange(N), target])
    assert jnp.allclose(loss, ref, atol=1e-6, rtol=1e-6), (loss, ref)

    # Exercise the tiled path: bf16 pred, 2-way core split, ragged last tile,
    # phantom-tile clamp (3 tiles over a (2, 2) grid) and the in-kernel upcast.
    N2 = 300
    logits2 = jax.random.normal(k1, (N2, C), dtype=jnp.float32)
    pred2 = jax.nn.log_softmax(logits2, axis=-1).astype(jnp.bfloat16)
    target2 = jax.random.randint(k2, (N2,), 0, C, dtype=jnp.int32)
    loss2 = get_loss(pred2, target2, None, tile_n=128)
    jax.block_until_ready(loss2)
    ref2 = -jnp.mean(pred2.astype(jnp.float32)[jnp.arange(N2), target2])
    assert jnp.allclose(loss2, ref2, atol=1e-3, rtol=1e-3), (loss2, ref2)

    print("KERNEL_OK")
</pallas_src>

<mosaic_0001>
module attributes {stable_mosaic.version = 11 : i64} {
  func.func @_nll_loss_kernel(%arg0: i32, %arg1: i32, %arg2: memref<8x40xf32, #tpu.memory_space<vmem>>, %arg3: memref<8x1xi16, #tpu.memory_space<vmem>>, %arg4: memref<1x1x40xf32, #tpu.memory_space<vmem>>) attributes {dimension_semantics = [#tpu.dimension_semantics<parallel>, #tpu.dimension_semantics<arbitrary>], iteration_bounds = array<i64: 1, 1>, scalar_prefetch = 0 : i64, scratch_operands = 0 : i64, tpu.core_type = #tpu.core_type<tc>, window_params = [{transform_indices = @transform_0, window_bounds = array<i64: 8, 40>}, {transform_indices = @transform_1, window_bounds = array<i64: 8, 1>}, {transform_indices = @transform_2, window_bounds = array<i64: 1, 1, 40>}]} {
    %c0_i32 = arith.constant 0 : i32
    %0 = arith.cmpi eq, %arg1, %c0_i32 : i32
    %1 = arith.extui %0 : i1 to i32
    %c0_i32_0 = arith.constant 0 : i32
    %2 = arith.cmpi ne, %1, %c0_i32_0 : i32
    scf.if %2 {
      %cst_12 = arith.constant 0.000000e+00 : f32
      %26 = vector.broadcast %cst_12 : f32 to vector<1x1x40xf32>
      %c0_13 = arith.constant 0 : index
      %c0_14 = arith.constant 0 : index
      %c0_15 = arith.constant 0 : index
      %27 = vector.load %arg4[%c0_13, %c0_14, %c0_15] : memref<1x1x40xf32, #tpu.memory_space<vmem>>, vector<1x1x40xf32>
      tpu.vector_store %arg4[%c0_13, %c0_14, %c0_15], %26 {strides = array<i32>} : memref<1x1x40xf32, #tpu.memory_space<vmem>>, vector<1x1x40xf32>,
    } else {
    }
    %c0 = arith.constant 0 : index
    %c0_1 = arith.constant 0 : index
    %3 = vector.load %arg2[%c0, %c0_1] : memref<8x40xf32, #tpu.memory_space<vmem>>, vector<8x40xf32>
    %c0_2 = arith.constant 0 : index
    %c0_3 = arith.constant 0 : index
    %4 = vector.load %arg3[%c0_2, %c0_3] : memref<8x1xi16, #tpu.memory_space<vmem>>, vector<8x1xi16>
    %5 = arith.extsi %4 : vector<8x1xi16> to vector<8x1xi32>
    %6 = tpu.iota {dimensions = array<i32: 1>} : vector<8x40xi32>
    %7 = tpu.iota {dimensions = array<i32: 0>} : vector<8x1xi32>
    %c1_i32 = arith.constant 1 : i32
    %8 = arith.muli %arg0, %c1_i32 : i32
    %9 = arith.addi %8, %arg1 : i32
    %c8_i32 = arith.constant 8 : i32
    %10 = arith.muli %9, %c8_i32 : i32
    %c8_i32_4 = arith.constant 8 : i32
    %11 = arith.subi %c8_i32_4, %10 : i32
    %12 = vector.broadcast %5 : vector<8x1xi32> to vector<8x40xi32>
    %13 = arith.cmpi eq, %6, %12 : vector<8x40xi32>
    %14 = vector.broadcast %11 : i32 to vector<8x1xi32>
    %15 = arith.cmpi slt, %7, %14 : vector<8x1xi32>
    %16 = vector.broadcast %15 : vector<8x1xi1> to vector<8x40xi1>
    %17 = arith.andi %13, %16 : vector<8x40xi1>
    %cst = arith.constant 0.000000e+00 : f32
    %18 = vector.broadcast %cst : f32 to vector<8x40xf32>
    %19 = arith.select %17, %3, %18 : vector<8x40xi1>, vector<8x40xf32>
    %c0_5 = arith.constant 0 : index
    %c0_6 = arith.constant 0 : index
    %c0_7 = arith.constant 0 : index
    %20 = vector.load %arg4[%c0_5, %c0_6, %c0_7] : memref<1x1x40xf32, #tpu.memory_space<vmem>>, vector<1x1x40xf32>
    %cst_8 = arith.constant dense<0.000000e+00> : vector<40xf32>
    %21 = vector.multi_reduction <add>, %19, %cst_8 [0] : vector<8x40xf32> to vector<40xf32>
    %22 = vector.shape_cast %21 : vector<40xf32> to vector<1x40xf32>
    %23 = vector.shape_cast %22 : vector<1x40xf32> to vector<1x1x40xf32>
    %24 = arith.addf %20, %23 : vector<1x1x40xf32>
    %c0_9 = arith.constant 0 : index
    %c0_10 = arith.constant 0 : index
    %c0_11 = arith.constant 0 : index
    %25 = vector.load %arg4[%c0_9, %c0_10, %c0_11] : memref<1x1x40xf32, #tpu.memory_space<vmem>>, vector<1x1x40xf32>
    tpu.vector_store %arg4[%c0_9, %c0_10, %c0_11], %24 {strides = array<i32>} : memref<1x1x40xf32, #tpu.memory_space<vmem>>, vector<1x1x40xf32>,
    return
  }
  func.func @transform_0(%arg0: i32, %arg1: i32) -> (i32, i32) {
    %c1_i32 = arith.constant 1 : i32
    %0 = arith.muli %arg0, %c1_i32 : i32
    %1 = arith.addi %0, %arg1 : i32
    %c0_i32 = arith.constant 0 : i32
    %2 = arith.minsi %1, %c0_i32 : i32
    %c0_i32_0 = arith.constant 0 : i32
    %c0_i32_1 = arith.constant 0 : i32
    return %2, %c0_i32_0 : i32, i32
  }
  func.func @transform_1(%arg0: i32, %arg1: i32) -> (i32, i32) {
    %c1_i32 = arith.constant 1 : i32
    %0 = arith.muli %arg0, %c1_i32 : i32
    %1 = arith.addi %0, %arg1 : i32
    %c0_i32 = arith.constant 0 : i32
    %2 = arith.minsi %1, %c0_i32 : i32
    %c0_i32_0 = arith.constant 0 : i32
    %c0_i32_1 = arith.constant 0 : i32
    return %2, %c0_i32_0 : i32, i32
  }
  func.func @transform_2(%arg0: i32, %arg1: i32) -> (i32, i32, i32) {
    %c0_i32 = arith.constant 0 : i32
    %c0_i32_0 = arith.constant 0 : i32
    %c0_i32_1 = arith.constant 0 : i32
    return %arg0, %c0_i32, %c0_i32_0 : i32, i32, i32
  }
}

</mosaic_0001>

<llo_original>
// kernel: tpu_custom_call.1
$region0: #{tpu_custom_call.1}
  #allocation0 [shape = 'u32[]', space=smem, size = 0x4, offset = 0x4, fixed_abs, tag = 'smem constant byte address 0x4 - core index']
  #allocation1 [shape = 'u32[144,128]{1,0:T(1,128)}', space=vmem, size = 0x12000, scoped, tag = 'internal scratch']
  %s0 = inlined_call_operand.hbm [shape: f32[8,40], index: 0, kind: input, shape index: {}]
  %s1 = inlined_call_operand.vmem [shape: s16[8,1], index: 1, kind: input, shape index: {}]
  %s2 = inlined_call_operand.hbm [shape: f32[1,1,40], index: 2, kind: output, shape index: {}]
  %s3 = sld [smem:[#allocation0]]
  $region26: #{tpu_custom_call.1} parent=0
    _
  %s5 = ssub.s32 1, %s3
  %s6 = scalar_select 0, %s5, %s3
  $region1: #{tpu_custom_call.1} parent=0
    #allocation2 [shape = 'u8[4096]{0}', space=vmem, size = 0x1000, scoped, tag = 'input window, operand 0, single buffered']
    #allocation3 [shape = 's32[1]{0}', space=sflag, size = 0x4, scoped, tag = 'scoped memory for tpu_custom_call.1']
    #allocation4 [shape = 's32[1]{0}', space=sflag, size = 0x4, scoped, tag = 'scoped memory for tpu_custom_call.1']
    #allocation5 [shape = 'u8[512]{0}', space=vmem, size = 0x400, scoped, tag = 'output window, operand 0, single buffered']
    %7 = vsyncpa [#allocation3], 0
    %8 = vsyncpa [#allocation4], 0
    // Predicated region
    $region2: #{tpu_custom_call.1} parent=1 // pred_check
      _
    $region3: #{tpu_custom_call.1} parent=1 // pred_check_branch
      %10 = sbr.rel (0) target = $region5
    $region4: #{tpu_custom_call.1} parent=1 // pred_region
      %s11 = sadd.s32 0, 0
      %p12 = scmp.lt.s32.totalorder %s11, 0
      %s13 = scalar_select %p12, %s11, 0
      %s15 = ssub.s32 128, 128
      %16 = vsyncadd [#allocation3], %s15
      %s17 = smul.addr %s13, 128
      %s18 = scalar_lea.hbm %s0, %s17
      %s20 = sshll.u32 [#allocation2], 4
      %s21 = int_to_ptr.vmem [resolvable:$true] %s20
      %23 = dma.hbm_to_vmem [thread:$0]  %s18, 128, %s21, [#allocation3]
    $region5: #{tpu_custom_call.1} parent=1 // pred_fallthru
      _
    // Predicated region
    $region6: #{tpu_custom_call.1} parent=1 // pred_check
      _
    $region7: #{tpu_custom_call.1} parent=1 // pred_check_branch
      %25 = sbr.rel (0) target = $region9
    $region8: #{tpu_custom_call.1} parent=1 // pred_region
      %s26 = sadd.s32 0, 0
      %p27 = scmp.lt.s32.totalorder %s26, 0
      %s28 = scalar_select %p27, %s26, 0
      %p29 = scmp.lt.s32.totalorder %s28, 0
      %s30 = scalar_select %p29, %s28, 0
      %s31 = smul.addr %s30, 4
      %s32 = scalar_lea.vmem %s1, %s31
      %s33 = sadd.s32 0, 0
      %p34 = scmp.lt.s32.totalorder %s33, 0
      %s35 = scalar_select %p34, %s33, 0
    $region9: #{tpu_custom_call.1} parent=1 // pred_fallthru
      _
    // Predicated region
    $region10: #{tpu_custom_call.1} parent=1 // pred_check
      _
    $region11: #{tpu_custom_call.1} parent=1 // pred_check_branch
      %37 = sbr.rel (0) target = $region13
    $region12: #{tpu_custom_call.1} parent=1 // pred_region
      %38 = dma.done [#allocation3], 128
    $region13: #{tpu_custom_call.1} parent=1 // pred_fallthru
      _
    %s39 = sadd.s32 0, 0
    %p40 = scmp.lt.s32.totalorder %s39, 0
    %s41 = scalar_select %p40, %s39, 0
    %p42 = scmp.lt.s32.totalorder %s41, 0
    %s43 = scalar_select %p42, %s41, 0
    %s44 = smul.addr %s43, 4
    %s45 = scalar_lea.vmem %s1, %s44
    %s46 = sadd.s32 0, 0
    %p47 = scmp.lt.s32.totalorder %s46, 0
    %s48 = scalar_select %p47, %s46, 0
    %s49 = sadd.s32 0, 0
    %p50 = scmp.lt.s32.totalorder %s49, 0
    %s51 = scalar_select %p50, %s49, 0
    %p52 = scmp.lt.s32.totalorder %s51, 0
    %s53 = scalar_select %p52, %s51, 0
    %s54 = smul.addr %s53, 4
    %s55 = scalar_lea.vmem %s1, %s54
    %s56 = sadd.s32 0, 0
    %p57 = scmp.lt.s32.totalorder %s56, 0
    %s58 = scalar_select %p57, %s56, 0
    %p59 = scmp.eq.s32.totalorder 0, 0
    // Predicated region
    $region14: #{tpu_custom_call.1} parent=1 // pred_check
      %p60 = pneg %p59
    $region15: #{tpu_custom_call.1} parent=1 // pred_check_branch
      %62 = sbr.rel (%p60) target = $region17
    $region16: #{tpu_custom_call.1} parent=1 // pred_region
      %vm63 = vcmask 319488
      %64 = vst.msk [vmem:[#allocation5] sm:$0x1] %vm63, 0.0
    $region17: #{tpu_custom_call.1} parent=1 // pred_fallthru
      _
    %v65 = vld [vmem:[#allocation2] sm:$0xff]
    %v66 = vld [vmem:[%s55] sm:$0xf]
    %v67 = vunpack.c.l.b16 %v66
    %v68 = vlaneseq
    %v69 = vand.u32 %v68, 127
    %v70 = vlaneseq
    %v71 = vshrl.u32 %v70, 7
    %s72 = sadd.s32 0, 0
    %s73 = smul.u32 %s72, 8
    %s74 = ssub.s32 8, %s73
    %75 = vset.pattern.permute.xlu0 0
    %76 = vperm.xlu0 %75, %v67
    %v77 = vpop.permute.xlu0 %76
    %vm78 = vcmp.eq.s32.totalorder %v69, %v77
    %v79 = vstv %s74
    %vm80 = vcmp.lt.s32.totalorder %v71, %v79
    %v81 = vsel %vm80, 1, 0
    %vm82 = vcmp.eq.s32.totalorder %v81, 1
    %vm83 = vmand %vm78, %vm82
    %v84 = vsel %vm83, %v65, 0.0
    %v85 = vld [vmem:[#allocation5] sm:$0x1]
    %vm86 = vcmask 326656
    %v87 = vsel %vm86, %v84, 0.0
    %v88 = vrot.slane %v87, 4
    %v89 = vadd.f32 %v87, %v88
    %v90 = vrot.slane %v89, 2
    %v91 = vadd.f32 %v89, %v90
    %v92 = vrot.slane %v91, 1
    %v93 = vadd.f32 %v91, %v92
    %v94 = vadd.f32 %v85, %v93
    %vm95 = vcmask 319488
    %96 = vst.msk [vmem:[#allocation5] sm:$0x1] %vm95, %v94
    // Predicated region
    $region18: #{tpu_custom_call.1} parent=1 // pred_check
      _
    $region19: #{tpu_custom_call.1} parent=1 // pred_check_branch
      %98 = sbr.rel (0) target = $region21
    $region20: #{tpu_custom_call.1} parent=1 // pred_region
      %s100 = ssub.s32 16, 16
      %101 = vsyncadd [#allocation4], %s100
      %s103 = sshll.u32 [#allocation5], 4
      %s104 = int_to_ptr.vmem [resolvable:$true] %s103
      %106 = dma.vmem_to_hbm [thread:$0]  %s104, 16, %s2, [#allocation4]
    $region21: #{tpu_custom_call.1} parent=1 // pred_fallthru
      _
    // Predicated region
    $region22: #{tpu_custom_call.1} parent=1 // pred_check
      _
    $region23: #{tpu_custom_call.1} parent=1 // pred_check_branch
      %108 = sbr.rel (0) target = $region25
    $region24: #{tpu_custom_call.1} parent=1 // pred_region
      %109 = dma.done [#allocation4], 16
    $region25: #{tpu_custom_call.1} parent=1 // pred_fallthru
      _
    %110 = vsyncpa [#allocation3], 1
    %111 = vsyncpa [#allocation4], 1

</llo_original>
